<compile_context>
chip_gen: v5e
topology: v5e:2x2
jax: 0.10.0
libtpu: 0.0.40
codegen_flags: <defaults>
</compile_context>

<pallas_src>
import functools
import math

import jax
import jax.numpy as jnp
from jax import lax
from jax.experimental import pallas as pl
from jax.experimental.pallas import tpu as pltpu

_LANE = 128
_SUBLANE = 8


def _round_up(x, m):
    return ((x + m - 1) // m) * m


# --------------------------------------------------------------------------
# Recurrent kernel: grid axis 0 = time-block (TT steps per grid step).
# W_h stays VMEM-resident; (h, c) carried across grid steps in VMEM scratch.
# --------------------------------------------------------------------------
def _lstm_rec_kernel(gx_ref, h0_ref, c0_ref, wh_ref,
                     hseq_ref, cT_ref,
                     h_scr, c_scr,
                     *, seq_len, tt_block):
    blk = pl.program_id(0)
    Hp = h0_ref.shape[1]

    @pl.when(blk == 0)
    def _():
        h_scr[...] = h0_ref[...].astype(jnp.bfloat16)
        c_scr[...] = c0_ref[...]

    wh = wh_ref[...]                               # (Hp, 4Hp) bf16, resident
    needs_mask = (seq_len % tt_block) != 0         # static Python bool

    def step(tt, carry):
        h_bf, c = carry                            # (Bp,Hp) bf16 / f32
        # Recurrent half of the gates; the x-projection was hoisted out.
        gates = gx_ref[tt] + jnp.dot(h_bf, wh,
                                     preferred_element_type=jnp.float32)
        # Lane-tile (128) aligned static slices (Hp % 128 == 0).
        i_t = jax.nn.sigmoid(gates[:, 0 * Hp:1 * Hp])
        f_t = jax.nn.sigmoid(gates[:, 1 * Hp:2 * Hp])
        g_t = jnp.tanh(gates[:, 2 * Hp:3 * Hp])
        o_t = jax.nn.sigmoid(gates[:, 3 * Hp:4 * Hp])
        c_new = f_t * c + i_t * g_t
        h_new = o_t * jnp.tanh(c_new)
        hseq_ref[tt] = h_new                       # f32 per-step output
        if needs_mask:                             # traced only if T % TT != 0
            valid = (blk * tt_block + tt) < seq_len
            c_new = jnp.where(valid, c_new, c)
            h_new = jnp.where(valid, h_new, h_bf.astype(jnp.float32))
        return h_new.astype(jnp.bfloat16), c_new

    h_bf, c = lax.fori_loop(0, tt_block, step,
                            (h_scr[...], c_scr[...]), unroll=True)
    h_scr[...] = h_bf
    c_scr[...] = c

    @pl.when(blk == pl.num_programs(0) - 1)
    def _():
        cT_ref[...] = c


# --------------------------------------------------------------------------
# Host-side weight packing:
#   W_x = [U_i U_f U_c U_o], W_h = [V_i V_f V_c V_o]  each padded [Hp, 4Hp] bf16
#   b   = [b_i b_f b_c b_o]  padded [1, 4Hp] f32
# --------------------------------------------------------------------------
def pack_params(raw, hidden_size):
    (U_i, V_i, b_i, U_f, V_f, b_f, U_c, V_c, b_c, U_o, V_o, b_o) = raw
    H = hidden_size
    Hp = _round_up(H, _LANE)
    Wx = jnp.zeros((Hp, 4 * Hp), jnp.float32)
    Wh = jnp.zeros((Hp, 4 * Hp), jnp.float32)
    b = jnp.zeros((1, 4 * Hp), jnp.float32)
    gates = ((U_i, V_i, b_i), (U_f, V_f, b_f),
             (U_c, V_c, b_c), (U_o, V_o, b_o))
    for k, (U, V, bb) in enumerate(gates):
        Wx = Wx.at[:H, k * Hp:k * Hp + H].set(U)
        Wh = Wh.at[:H, k * Hp:k * Hp + H].set(V)
        b = b.at[0, k * Hp:k * Hp + H].set(bb)
    return {"Wx": Wx.astype(jnp.bfloat16), "Wh": Wh.astype(jnp.bfloat16),
            "b": b, "H": H, "Hp": Hp}


# --------------------------------------------------------------------------
# Wrappers
# --------------------------------------------------------------------------
def lstm_sequence(xs, hidden, params, *, tt_block=8):
    """Run T LSTM-cell steps (input projection hoisted, recurrence in Pallas).

    xs: [T, B, H] f32.  hidden: (h, c) each [B, H] f32, or None / non-tuple.
    Returns (h_seq [T, B, H] f32, (h_T, c_T)).
    """
    T, B, H = xs.shape
    assert H == params["H"]
    Hp = params["Hp"]
    Bp = _round_up(max(B, _SUBLANE), _SUBLANE)
    TT = max(1, min(tt_block, T))
    Tp = _round_up(T, TT)
    n_blocks = Tp // TT

    if hidden is None or not isinstance(hidden, tuple):
        h0 = jnp.zeros((B, H), jnp.float32)
        c0 = jnp.zeros((B, H), jnp.float32)
    else:
        h0, c0 = hidden

    def pad_state(a):
        return jnp.zeros((Bp, Hp), jnp.float32).at[:B, :H].set(a)

    h0_p, c0_p = pad_state(h0), pad_state(c0)

    # ---- time-parallel input projection (hoisted out of the recurrence) ----
    # M = Tp*Bp fills the MXU; bf16 inputs, f32 accumulation.  Plain XLA dot.
    xs_bf = jnp.zeros((Tp, Bp, Hp), jnp.bfloat16).at[:T, :B, :H].set(
        xs.astype(jnp.bfloat16))
    gx = (jnp.dot(xs_bf.reshape(Tp * Bp, Hp), params["Wx"],
                  preferred_element_type=jnp.float32)
          + params["b"]).reshape(Tp, Bp, 4 * Hp)

    Wh = params["Wh"]

    # ---- VMEM budget (explicit; clamped so it also fits v7x's 64 MiB) ----
    wh_bytes = Wh.size * 2
    gx_blk = TT * Bp * 4 * Hp * 4
    hseq_blk = TT * Bp * Hp * 4
    state = Bp * Hp * 4
    vmem_needed = 2 * wh_bytes + 2 * gx_blk + 2 * hseq_blk + 8 * state
    vmem_limit = int(min(max(vmem_needed + (4 << 20), 16 << 20), 48 << 20))
    # TODO(synk): if 2*wh_bytes exceeds the limit (Hp >~ 1700), tile the 4*Hp
    # gate axis with a second grid dimension instead of keeping W_h resident.

    flops = 2 * Tp * Bp * Hp * (4 * Hp)            # recurrent matmul only
    transcendentals = 5 * Tp * Bp * Hp             # 3 sigmoid + 2 tanh / elem
    bytes_accessed = wh_bytes + gx.size * 4 + Tp * Bp * Hp * 4 + 3 * state

    kernel = functools.partial(_lstm_rec_kernel, seq_len=T, tt_block=TT)

    def build_call(single_buffer_consts):
        def const_spec(shape):
            kwargs = {}
            if single_buffer_consts:
                # Constant index_map -> single buffer is enough (VMEM saving).
                kwargs["pipeline_mode"] = pl.Buffered(1)
            return pl.BlockSpec(shape, lambda b: (0,) * len(shape), **kwargs)

        return pl.pallas_call(
            kernel,
            out_shape=(
                jax.ShapeDtypeStruct((Tp, Bp, Hp), jnp.float32),   # h per step
                jax.ShapeDtypeStruct((Bp, Hp), jnp.float32),       # c_T
            ),
            grid_spec=pltpu.PrefetchScalarGridSpec(
                num_scalar_prefetch=0,
                grid=(n_blocks,),
                in_specs=[
                    pl.BlockSpec((TT, Bp, 4 * Hp), lambda b: (b, 0, 0)),  # gx
                    const_spec((Bp, Hp)),                                 # h0
                    const_spec((Bp, Hp)),                                 # c0
                    const_spec((Hp, 4 * Hp)),                             # W_h
                ],
                out_specs=(
                    pl.BlockSpec((TT, Bp, Hp), lambda b: (b, 0, 0)),      # h_seq
                    pl.BlockSpec((Bp, Hp), lambda b: (0, 0)),             # c_T
                ),
                scratch_shapes=[
                    pltpu.VMEM((Bp, Hp), jnp.bfloat16),   # recurrent h (bf16 shadow)
                    pltpu.VMEM((Bp, Hp), jnp.float32),    # recurrent c (f32)
                ],
            ),
            compiler_params=pltpu.CompilerParams(
                dimension_semantics=("arbitrary",),       # true recurrence
                vmem_limit_bytes=vmem_limit,
            ),
            cost_estimate=pl.CostEstimate(
                flops=flops,
                transcendentals=transcendentals,
                bytes_accessed=bytes_accessed,
            ),
        )

    try:
        hseq_p, cT_p = build_call(True)(gx, h0_p, c0_p, Wh)
    except Exception:
        # pipeline_mode=pl.Buffered(1) not supported on this jax build:
        # fall back to default double buffering (identical semantics).
        hseq_p, cT_p = build_call(False)(gx, h0_p, c0_p, Wh)

    h_seq = hseq_p[:T, :B, :H]
    h_T = h_seq[T - 1]
    c_T = cT_p[:B, :H]
    return h_seq, (h_T, c_T)


def lstm_cell(x, hidden, params):
    """Single-step forward, mimicking BiDirectionalLSTM.forward(input, hidden)."""
    h_seq, (h_T, c_T) = lstm_sequence(x[None], hidden, params, tt_block=1)
    return h_seq[0], (h_T, c_T)


# --------------------------------------------------------------------------
# Init + pure-JAX reference (for verification)
# --------------------------------------------------------------------------
def init_params(key, hidden_size):
    """Matches init_weights(): uniform(-stdv, stdv), stdv = 1/sqrt(H)."""
    stdv = 1.0 / math.sqrt(hidden_size)
    keys = jax.random.split(key, 12)
    u = lambda k, shape: jax.random.uniform(
        k, shape, jnp.float32, minval=-stdv, maxval=stdv)
    raw = (
        u(keys[0], (hidden_size, hidden_size)),   # U_i
        u(keys[1], (hidden_size, hidden_size)),   # V_i
        u(keys[2], (hidden_size,)),               # b_i
        u(keys[3], (hidden_size, hidden_size)),   # U_f
        u(keys[4], (hidden_size, hidden_size)),   # V_f
        u(keys[5], (hidden_size,)),               # b_f
        u(keys[6], (hidden_size, hidden_size)),   # U_c
        u(keys[7], (hidden_size, hidden_size)),   # V_c
        u(keys[8], (hidden_size,)),               # b_c
        u(keys[9], (hidden_size, hidden_size)),   # U_o
        u(keys[10], (hidden_size, hidden_size)),  # V_o
        u(keys[11], (hidden_size,)),              # b_o
    )
    return pack_params(raw, hidden_size), raw


def reference_step(x, hidden, raw):
    (U_i, V_i, b_i, U_f, V_f, b_f, U_c, V_c, b_c, U_o, V_o, b_o) = raw
    h, c = hidden
    i_t = jax.nn.sigmoid(x @ U_i + h @ V_i + b_i)
    f_t = jax.nn.sigmoid(x @ U_f + h @ V_f + b_f)
    g_t = jnp.tanh(x @ U_c + h @ V_c + b_c)
    o_t = jax.nn.sigmoid(x @ U_o + h @ V_o + b_o)
    c_new = f_t * c + i_t * g_t
    h_new = o_t * jnp.tanh(c_new)
    return h_new, (h_new, c_new)


if __name__ == "__main__":
    hidden_size = 32
    batch = 2
    seq = 8

    key = jax.random.PRNGKey(0)
    k_param, k_x, k_h, k_c = jax.random.split(key, 4)

    params, raw = init_params(k_param, hidden_size)

    xs = jax.random.normal(k_x, (seq, batch, hidden_size), jnp.float32)
    h0 = jax.random.normal(k_h, (batch, hidden_size), jnp.float32)
    c0 = jax.random.normal(k_c, (batch, hidden_size), jnp.float32)

    # ---- single-step (exact forward() semantics) ----
    out, (h1, c1) = lstm_cell(xs[0], (h0, c0), params)
    out = jax.block_until_ready(out)
    ref_out, (ref_h1, ref_c1) = reference_step(xs[0], (h0, c0), raw)
    assert jnp.allclose(out, ref_out, atol=2e-2, rtol=2e-2)
    assert jnp.allclose(c1, ref_c1, atol=2e-2, rtol=2e-2)

    # ---- full sequence, T a multiple of TT (no time padding) ----
    h_seq, (hT, cT) = lstm_sequence(xs, (h0, c0), params, tt_block=8)
    h_seq = jax.block_until_ready(h_seq)

    ref_state = (h0, c0)
    ref_hs = []
    for t in range(seq):
        ref_o, ref_state = reference_step(xs[t], ref_state, raw)
        ref_hs.append(ref_o)
    ref_hs = jnp.stack(ref_hs, axis=0)

    assert jnp.allclose(h_seq, ref_hs, atol=2e-2, rtol=2e-2)
    assert jnp.allclose(hT, ref_state[0], atol=2e-2, rtol=2e-2)
    assert jnp.allclose(cT, ref_state[1], atol=2e-2, rtol=2e-2)

    # ---- ragged sequence length (exercises the padded-timestep mask) ----
    T2 = 5
    h_seq2, (hT2, cT2) = lstm_sequence(xs[:T2], (h0, c0), params, tt_block=4)
    h_seq2 = jax.block_until_ready(h_seq2)

    ref_state = (h0, c0)
    ref_hs2 = []
    for t in range(T2):
        ref_o, ref_state = reference_step(xs[t], ref_state, raw)
        ref_hs2.append(ref_o)
    ref_hs2 = jnp.stack(ref_hs2, axis=0)

    assert jnp.allclose(h_seq2, ref_hs2, atol=2e-2, rtol=2e-2)
    assert jnp.allclose(hT2, ref_state[0], atol=2e-2, rtol=2e-2)
    assert jnp.allclose(cT2, ref_state[1], atol=2e-2, rtol=2e-2)

    print("KERNEL_OK")
</pallas_src>

<mosaic_0001>
module attributes {stable_mosaic.version = 11 : i64} {
  func.func @_lstm_rec_kernel(%arg0: i32, %arg1: memref<1x8x512xf32, #tpu.memory_space<vmem>>, %arg2: memref<8x128xf32, #tpu.memory_space<vmem>>, %arg3: memref<8x128xf32, #tpu.memory_space<vmem>>, %arg4: memref<128x512xbf16, #tpu.memory_space<vmem>>, %arg5: memref<1x8x128xf32, #tpu.memory_space<vmem>>, %arg6: memref<8x128xf32, #tpu.memory_space<vmem>>, %arg7: memref<8x128xbf16, #tpu.memory_space<vmem>>, %arg8: memref<8x128xf32, #tpu.memory_space<vmem>>) attributes {dimension_semantics = [#tpu.dimension_semantics<arbitrary>], iteration_bounds = array<i64: 1>, scalar_prefetch = 0 : i64, scratch_operands = 2 : i64, tpu.core_type = #tpu.core_type<tc>, window_params = [{transform_indices = @transform_0, window_bounds = array<i64: 1, 8, 512>}, {pipeline_mode = #tpu.pipeline_mode<synchronous>, transform_indices = @transform_1, window_bounds = array<i64: 8, 128>}, {pipeline_mode = #tpu.pipeline_mode<synchronous>, transform_indices = @transform_2, window_bounds = array<i64: 8, 128>}, {pipeline_mode = #tpu.pipeline_mode<synchronous>, transform_indices = @transform_3, window_bounds = array<i64: 128, 512>}, {transform_indices = @transform_4, window_bounds = array<i64: 1, 8, 128>}, {pipeline_mode = #tpu.pipeline_mode<synchronous>, transform_indices = @transform_5, window_bounds = array<i64: 8, 128>}]} {
    %c0_i32 = arith.constant 0 : i32
    %0 = arith.cmpi eq, %arg0, %c0_i32 : i32
    %1 = arith.extui %0 : i1 to i32
    %c0_i32_0 = arith.constant 0 : i32
    %2 = arith.cmpi ne, %1, %c0_i32_0 : i32
    scf.if %2 {
      %c0_20 = arith.constant 0 : index
      %c0_21 = arith.constant 0 : index
      %46 = vector.load %arg2[%c0_20, %c0_21] : memref<8x128xf32, #tpu.memory_space<vmem>>, vector<8x128xf32>
      %47 = arith.truncf %46 : vector<8x128xf32> to vector<8x128xbf16>
      %c0_22 = arith.constant 0 : index
      %c0_23 = arith.constant 0 : index
      %48 = vector.load %arg7[%c0_22, %c0_23] : memref<8x128xbf16, #tpu.memory_space<vmem>>, vector<8x128xbf16>
      tpu.vector_store %arg7[%c0_22, %c0_23], %47 {strides = array<i32>} : memref<8x128xbf16, #tpu.memory_space<vmem>>, vector<8x128xbf16>,
      %c0_24 = arith.constant 0 : index
      %c0_25 = arith.constant 0 : index
      %49 = vector.load %arg3[%c0_24, %c0_25] : memref<8x128xf32, #tpu.memory_space<vmem>>, vector<8x128xf32>
      %c0_26 = arith.constant 0 : index
      %c0_27 = arith.constant 0 : index
      %50 = vector.load %arg8[%c0_26, %c0_27] : memref<8x128xf32, #tpu.memory_space<vmem>>, vector<8x128xf32>
      tpu.vector_store %arg8[%c0_26, %c0_27], %49 {strides = array<i32>} : memref<8x128xf32, #tpu.memory_space<vmem>>, vector<8x128xf32>,
    } else {
    }
    %c0 = arith.constant 0 : index
    %c0_1 = arith.constant 0 : index
    %3 = vector.load %arg4[%c0, %c0_1] : memref<128x512xbf16, #tpu.memory_space<vmem>>, vector<128x512xbf16>
    %c0_2 = arith.constant 0 : index
    %c0_3 = arith.constant 0 : index
    %4 = vector.load %arg7[%c0_2, %c0_3] : memref<8x128xbf16, #tpu.memory_space<vmem>>, vector<8x128xbf16>
    %c0_4 = arith.constant 0 : index
    %c0_5 = arith.constant 0 : index
    %5 = vector.load %arg8[%c0_4, %c0_5] : memref<8x128xf32, #tpu.memory_space<vmem>>, vector<8x128xf32>
    %c0_i32_6 = arith.constant 0 : i32
    %6 = arith.index_cast %c0_i32_6 : i32 to index
    %c0_7 = arith.constant 0 : index
    %c0_8 = arith.constant 0 : index
    %7 = vector.load %arg1[%6, %c0_7, %c0_8] : memref<1x8x512xf32, #tpu.memory_space<vmem>>, vector<1x8x512xf32>
    %8 = vector.shape_cast %7 : vector<1x8x512xf32> to vector<8x512xf32>
    %cst = arith.constant dense<0.000000e+00> : vector<8x512xf32>
    %9 = tpu.matmul %4, %3, %cst {dimension_numbers = #tpu.dot_dimension_numbers<[1], [0], [0], [1], [0, 0, 1, 1], [], []>} : vector<8x128xbf16>, vector<128x512xbf16>, vector<8x512xf32> -> vector<8x512xf32>
    %10 = arith.addf %8, %9 : vector<8x512xf32>
    %11 = vector.extract_strided_slice %10 {offsets = [0, 0], sizes = [8, 128], strides = [1, 1]} : vector<8x512xf32> to vector<8x128xf32>
    %12 = arith.negf %11 : vector<8x128xf32>
    %13 = math.exp %12 : vector<8x128xf32>
    %cst_9 = arith.constant 1.000000e+00 : f32
    %14 = vector.broadcast %cst_9 : f32 to vector<8x128xf32>
    %15 = arith.addf %14, %13 : vector<8x128xf32>
    %16 = arith.divf %14, %15 : vector<8x128xf32>
    %17 = vector.extract_strided_slice %10 {offsets = [0, 128], sizes = [8, 128], strides = [1, 1]} : vector<8x512xf32> to vector<8x128xf32>
    %18 = arith.negf %17 : vector<8x128xf32>
    %19 = math.exp %18 : vector<8x128xf32>
    %cst_10 = arith.constant 1.000000e+00 : f32
    %20 = vector.broadcast %cst_10 : f32 to vector<8x128xf32>
    %21 = arith.addf %20, %19 : vector<8x128xf32>
    %22 = arith.divf %20, %21 : vector<8x128xf32>
    %23 = vector.extract_strided_slice %10 {offsets = [0, 256], sizes = [8, 128], strides = [1, 1]} : vector<8x512xf32> to vector<8x128xf32>
    %24 = math.tanh %23 : vector<8x128xf32>
    %25 = vector.extract_strided_slice %10 {offsets = [0, 384], sizes = [8, 128], strides = [1, 1]} : vector<8x512xf32> to vector<8x128xf32>
    %26 = arith.negf %25 : vector<8x128xf32>
    %27 = math.exp %26 : vector<8x128xf32>
    %cst_11 = arith.constant 1.000000e+00 : f32
    %28 = vector.broadcast %cst_11 : f32 to vector<8x128xf32>
    %29 = arith.addf %28, %27 : vector<8x128xf32>
    %30 = arith.divf %28, %29 : vector<8x128xf32>
    %31 = arith.mulf %22, %5 : vector<8x128xf32>
    %32 = arith.mulf %16, %24 : vector<8x128xf32>
    %33 = arith.addf %31, %32 : vector<8x128xf32>
    %34 = math.tanh %33 : vector<8x128xf32>
    %35 = arith.mulf %30, %34 : vector<8x128xf32>
    %36 = arith.index_cast %c0_i32_6 : i32 to index
    %c0_12 = arith.constant 0 : index
    %c0_13 = arith.constant 0 : index
    %37 = vector.load %arg5[%36, %c0_12, %c0_13] : memref<1x8x128xf32, #tpu.memory_space<vmem>>, vector<1x8x128xf32>
    %38 = vector.shape_cast %37 : vector<1x8x128xf32> to vector<8x128xf32>
    %39 = vector.shape_cast %35 : vector<8x128xf32> to vector<1x8x128xf32>
    tpu.vector_store %arg5[%36, %c0_12, %c0_13], %39 {strides = array<i32>} : memref<1x8x128xf32, #tpu.memory_space<vmem>>, vector<1x8x128xf32>,
    %40 = arith.truncf %35 : vector<8x128xf32> to vector<8x128xbf16>
    %c1_i32 = arith.constant 1 : i32
    %c0_14 = arith.constant 0 : index
    %c0_15 = arith.constant 0 : index
    %41 = vector.load %arg7[%c0_14, %c0_15] : memref<8x128xbf16, #tpu.memory_space<vmem>>, vector<8x128xbf16>
    tpu.vector_store %arg7[%c0_14, %c0_15], %40 {strides = array<i32>} : memref<8x128xbf16, #tpu.memory_space<vmem>>, vector<8x128xbf16>,
    %c0_16 = arith.constant 0 : index
    %c0_17 = arith.constant 0 : index
    %42 = vector.load %arg8[%c0_16, %c0_17] : memref<8x128xf32, #tpu.memory_space<vmem>>, vector<8x128xf32>
    tpu.vector_store %arg8[%c0_16, %c0_17], %33 {strides = array<i32>} : memref<8x128xf32, #tpu.memory_space<vmem>>, vector<8x128xf32>,
    %c0_i32_18 = arith.constant 0 : i32
    %43 = arith.cmpi eq, %arg0, %c0_i32_18 : i32
    %44 = arith.extui %43 : i1 to i32
    %c0_i32_19 = arith.constant 0 : i32
    %45 = arith.cmpi ne, %44, %c0_i32_19 : i32
    scf.if %45 {
      %c0_20 = arith.constant 0 : index
      %c0_21 = arith.constant 0 : index
      %46 = vector.load %arg6[%c0_20, %c0_21] : memref<8x128xf32, #tpu.memory_space<vmem>>, vector<8x128xf32>
      tpu.vector_store %arg6[%c0_20, %c0_21], %33 {strides = array<i32>} : memref<8x128xf32, #tpu.memory_space<vmem>>, vector<8x128xf32>,
    } else {
    }
    return
  }
  func.func @transform_0(%arg0: i32) -> (i32, i32, i32) {
    %c0_i32 = arith.constant 0 : i32
    %c0_i32_0 = arith.constant 0 : i32
    %c0_i32_1 = arith.constant 0 : i32
    return %arg0, %c0_i32, %c0_i32_0 : i32, i32, i32
  }
  func.func @transform_1(%arg0: i32) -> (i32, i32) {
    %c0_i32 = arith.constant 0 : i32
    %c0_i32_0 = arith.constant 0 : i32
    %c0_i32_1 = arith.constant 0 : i32
    return %c0_i32, %c0_i32_0 : i32, i32
  }
  func.func @transform_2(%arg0: i32) -> (i32, i32) {
    %c0_i32 = arith.constant 0 : i32
    %c0_i32_0 = arith.constant 0 : i32
    %c0_i32_1 = arith.constant 0 : i32
    return %c0_i32, %c0_i32_0 : i32, i32
  }
  func.func @transform_3(%arg0: i32) -> (i32, i32) {
    %c0_i32 = arith.constant 0 : i32
    %c0_i32_0 = arith.constant 0 : i32
    %c0_i32_1 = arith.constant 0 : i32
    return %c0_i32, %c0_i32_0 : i32, i32
  }
  func.func @transform_4(%arg0: i32) -> (i32, i32, i32) {
    %c0_i32 = arith.constant 0 : i32
    %c0_i32_0 = arith.constant 0 : i32
    %c0_i32_1 = arith.constant 0 : i32
    return %arg0, %c0_i32, %c0_i32_0 : i32, i32, i32
  }
  func.func @transform_5(%arg0: i32) -> (i32, i32) {
    %c0_i32 = arith.constant 0 : i32
    %c0_i32_0 = arith.constant 0 : i32
    %c0_i32_1 = arith.constant 0 : i32
    return %c0_i32, %c0_i32_0 : i32, i32
  }
}

module attributes {stable_mosaic.version = 11 : i64} {
  func.func @_lstm_rec_kernel(%arg0: i32, %arg1: memref<1x8x512xf32, #tpu.memory_space<vmem>>, %arg2: memref<8x128xf32, #tpu.memory_space<vmem>>, %arg3: memref<8x128xf32, #tpu.memory_space<vmem>>, %arg4: memref<128x512xbf16, #tpu.memory_space<vmem>>, %arg5: memref<1x8x128xf32, #tpu.memory_space<vmem>>, %arg6: memref<8x128xf32, #tpu.memory_space<vmem>>, %arg7: memref<8x128xbf16, #tpu.memory_space<vmem>>, %arg8: memref<8x128xf32, #tpu.memory_space<vmem>>) attributes {dimension_semantics = [#tpu.dimension_semantics<arbitrary>], iteration_bounds = array<i64: 1>, scalar_prefetch = 0 : i64, scratch_operands = 2 : i64, tpu.core_type = #tpu.core_type<tc>, window_params = [{transform_indices = @transform_0, window_bounds = array<i64: 1, 8, 512>}, {pipeline_mode = #tpu.pipeline_mode<synchronous>, transform_indices = @transform_1, window_bounds = array<i64: 8, 128>}, {pipeline_mode = #tpu.pipeline_mode<synchronous>, transform_indices = @transform_2, window_bounds = array<i64: 8, 128>}, {pipeline_mode = #tpu.pipeline_mode<synchronous>, transform_indices = @transform_3, window_bounds = array<i64: 128, 512>}, {transform_indices = @transform_4, window_bounds = array<i64: 1, 8, 128>}, {pipeline_mode = #tpu.pipeline_mode<synchronous>, transform_indices = @transform_5, window_bounds = array<i64: 8, 128>}]} {
    %c0_i32 = arith.constant 0 : i32
    %0 = arith.cmpi eq, %arg0, %c0_i32 : i32
    %1 = arith.extui %0 : i1 to i32
    %c0_i32_0 = arith.constant 0 : i32
    %2 = arith.cmpi ne, %1, %c0_i32_0 : i32
    scf.if %2 {
      %c0_20 = arith.constant 0 : index
      %c0_21 = arith.constant 0 : index
      %46 = vector.load %arg2[%c0_20, %c0_21] : memref<8x128xf32, #tpu.memory_space<vmem>>, vector<8x128xf32>
      %47 = arith.truncf %46 : vector<8x128xf32> to vector<8x128xbf16>
      %c0_22 = arith.constant 0 : index
      %c0_23 = arith.constant 0 : index
      %48 = vector.load %arg7[%c0_22, %c0_23] : memref<8x128xbf16, #tpu.memory_space<vmem>>, vector<8x128xbf16>
      tpu.vector_store %arg7[%c0_22, %c0_23], %47 {strides = array<i32>} : memref<8x128xbf16, #tpu.memory_space<vmem>>, vector<8x128xbf16>,
      %c0_24 = arith.constant 0 : index
      %c0_25 = arith.constant 0 : index
      %49 = vector.load %arg3[%c0_24, %c0_25] : memref<8x128xf32, #tpu.memory_space<vmem>>, vector<8x128xf32>
      %c0_26 = arith.constant 0 : index
      %c0_27 = arith.constant 0 : index
      %50 = vector.load %arg8[%c0_26, %c0_27] : memref<8x128xf32, #tpu.memory_space<vmem>>, vector<8x128xf32>
      tpu.vector_store %arg8[%c0_26, %c0_27], %49 {strides = array<i32>} : memref<8x128xf32, #tpu.memory_space<vmem>>, vector<8x128xf32>,
    } else {
    }
    %c0 = arith.constant 0 : index
    %c0_1 = arith.constant 0 : index
    %3 = vector.load %arg4[%c0, %c0_1] : memref<128x512xbf16, #tpu.memory_space<vmem>>, vector<128x512xbf16>
    %c0_2 = arith.constant 0 : index
    %c0_3 = arith.constant 0 : index
    %4 = vector.load %arg7[%c0_2, %c0_3] : memref<8x128xbf16, #tpu.memory_space<vmem>>, vector<8x128xbf16>
    %c0_4 = arith.constant 0 : index
    %c0_5 = arith.constant 0 : index
    %5 = vector.load %arg8[%c0_4, %c0_5] : memref<8x128xf32, #tpu.memory_space<vmem>>, vector<8x128xf32>
    %c0_i32_6 = arith.constant 0 : i32
    %6 = arith.index_cast %c0_i32_6 : i32 to index
    %c0_7 = arith.constant 0 : index
    %c0_8 = arith.constant 0 : index
    %7 = vector.load %arg1[%6, %c0_7, %c0_8] : memref<1x8x512xf32, #tpu.memory_space<vmem>>, vector<1x8x512xf32>
    %8 = vector.shape_cast %7 : vector<1x8x512xf32> to vector<8x512xf32>
    %cst = arith.constant dense<0.000000e+00> : vector<8x512xf32>
    %9 = tpu.matmul %4, %3, %cst {dimension_numbers = #tpu.dot_dimension_numbers<[1], [0], [0], [1], [0, 0, 1, 1], [], []>} : vector<8x128xbf16>, vector<128x512xbf16>, vector<8x512xf32> -> vector<8x512xf32>
    %10 = arith.addf %8, %9 : vector<8x512xf32>
    %11 = vector.extract_strided_slice %10 {offsets = [0, 0], sizes = [8, 128], strides = [1, 1]} : vector<8x512xf32> to vector<8x128xf32>
    %12 = arith.negf %11 : vector<8x128xf32>
    %13 = math.exp %12 : vector<8x128xf32>
    %cst_9 = arith.constant 1.000000e+00 : f32
    %14 = vector.broadcast %cst_9 : f32 to vector<8x128xf32>
    %15 = arith.addf %14, %13 : vector<8x128xf32>
    %16 = arith.divf %14, %15 : vector<8x128xf32>
    %17 = vector.extract_strided_slice %10 {offsets = [0, 128], sizes = [8, 128], strides = [1, 1]} : vector<8x512xf32> to vector<8x128xf32>
    %18 = arith.negf %17 : vector<8x128xf32>
    %19 = math.exp %18 : vector<8x128xf32>
    %cst_10 = arith.constant 1.000000e+00 : f32
    %20 = vector.broadcast %cst_10 : f32 to vector<8x128xf32>
    %21 = arith.addf %20, %19 : vector<8x128xf32>
    %22 = arith.divf %20, %21 : vector<8x128xf32>
    %23 = vector.extract_strided_slice %10 {offsets = [0, 256], sizes = [8, 128], strides = [1, 1]} : vector<8x512xf32> to vector<8x128xf32>
    %24 = math.tanh %23 : vector<8x128xf32>
    %25 = vector.extract_strided_slice %10 {offsets = [0, 384], sizes = [8, 128], strides = [1, 1]} : vector<8x512xf32> to vector<8x128xf32>
    %26 = arith.negf %25 : vector<8x128xf32>
    %27 = math.exp %26 : vector<8x128xf32>
    %cst_11 = arith.constant 1.000000e+00 : f32
    %28 = vector.broadcast %cst_11 : f32 to vector<8x128xf32>
    %29 = arith.addf %28, %27 : vector<8x128xf32>
    %30 = arith.divf %28, %29 : vector<8x128xf32>
    %31 = arith.mulf %22, %5 : vector<8x128xf32>
    %32 = arith.mulf %16, %24 : vector<8x128xf32>
    %33 = arith.addf %31, %32 : vector<8x128xf32>
    %34 = math.tanh %33 : vector<8x128xf32>
    %35 = arith.mulf %30, %34 : vector<8x128xf32>
    %36 = arith.index_cast %c0_i32_6 : i32 to index
    %c0_12 = arith.constant 0 : index
    %c0_13 = arith.constant 0 : index
    %37 = vector.load %arg5[%36, %c0_12, %c0_13] : memref<1x8x128xf32, #tpu.memory_space<vmem>>, vector<1x8x128xf32>
    %38 = vector.shape_cast %37 : vector<1x8x128xf32> to vector<8x128xf32>
    %39 = vector.shape_cast %35 : vector<8x128xf32> to vector<1x8x128xf32>
    tpu.vector_store %arg5[%36, %c0_12, %c0_13], %39 {strides = array<i32>} : memref<1x8x128xf32, #tpu.memory_space<vmem>>, vector<1x8x128xf32>,
    %40 = arith.truncf %35 : vector<8x128xf32> to vector<8x128xbf16>
    %c1_i32 = arith.constant 1 : i32
    %c0_14 = arith.constant 0 : index
    %c0_15 = arith.constant 0 : index
    %41 = vector.load %arg7[%c0_14, %c0_15] : memref<8x128xbf16, #tpu.memory_space<vmem>>, vector<8x128xbf16>
    tpu.vector_store %arg7[%c0_14, %c0_15], %40 {strides = array<i32>} : memref<8x128xbf16, #tpu.memory_space<vmem>>, vector<8x128xbf16>,
    %c0_16 = arith.constant 0 : index
    %c0_17 = arith.constant 0 : index
    %42 = vector.load %arg8[%c0_16, %c0_17] : memref<8x128xf32, #tpu.memory_space<vmem>>, vector<8x128xf32>
    tpu.vector_store %arg8[%c0_16, %c0_17], %33 {strides = array<i32>} : memref<8x128xf32, #tpu.memory_space<vmem>>, vector<8x128xf32>,
    %c0_i32_18 = arith.constant 0 : i32
    %43 = arith.cmpi eq, %arg0, %c0_i32_18 : i32
    %44 = arith.extui %43 : i1 to i32
    %c0_i32_19 = arith.constant 0 : i32
    %45 = arith.cmpi ne, %44, %c0_i32_19 : i32
    scf.if %45 {
      %c0_20 = arith.constant 0 : index
      %c0_21 = arith.constant 0 : index
      %46 = vector.load %arg6[%c0_20, %c0_21] : memref<8x128xf32, #tpu.memory_space<vmem>>, vector<8x128xf32>
      tpu.vector_store %arg6[%c0_20, %c0_21], %33 {strides = array<i32>} : memref<8x128xf32, #tpu.memory_space<vmem>>, vector<8x128xf32>,
    } else {
    }
    return
  }
  func.func @transform_0(%arg0: i32) -> (i32, i32, i32) {
    %c0_i32 = arith.constant 0 : i32
    %c0_i32_0 = arith.constant 0 : i32
    %c0_i32_1 = arith.constant 0 : i32
    return %arg0, %c0_i32, %c0_i32_0 : i32, i32, i32
  }
  func.func @transform_1(%arg0: i32) -> (i32, i32) {
    %c0_i32 = arith.constant 0 : i32
    %c0_i32_0 = arith.constant 0 : i32
    %c0_i32_1 = arith.constant 0 : i32
    return %c0_i32, %c0_i32_0 : i32, i32
  }
  func.func @transform_2(%arg0: i32) -> (i32, i32) {
    %c0_i32 = arith.constant 0 : i32
    %c0_i32_0 = arith.constant 0 : i32
    %c0_i32_1 = arith.constant 0 : i32
    return %c0_i32, %c0_i32_0 : i32, i32
  }
  func.func @transform_3(%arg0: i32) -> (i32, i32) {
    %c0_i32 = arith.constant 0 : i32
    %c0_i32_0 = arith.constant 0 : i32
    %c0_i32_1 = arith.constant 0 : i32
    return %c0_i32, %c0_i32_0 : i32, i32
  }
  func.func @transform_4(%arg0: i32) -> (i32, i32, i32) {
    %c0_i32 = arith.constant 0 : i32
    %c0_i32_0 = arith.constant 0 : i32
    %c0_i32_1 = arith.constant 0 : i32
    return %arg0, %c0_i32, %c0_i32_0 : i32, i32, i32
  }
  func.func @transform_5(%arg0: i32) -> (i32, i32) {
    %c0_i32 = arith.constant 0 : i32
    %c0_i32_0 = arith.constant 0 : i32
    %c0_i32_1 = arith.constant 0 : i32
    return %c0_i32, %c0_i32_0 : i32, i32
  }
}

</mosaic_0001>

<llo_original>
// kernel: tpu_custom_call.1
$region0: #{tpu_custom_call.1}
  #allocation0 [shape = 'u32[]', space=smem, size = 0x4, offset = 0x4, fixed_abs, tag = 'smem constant byte address 0x4 - core index']
  #allocation1 [shape = 'u32[72,128]{1,0:T(1,128)}', space=vmem, size = 0x9000, scoped, tag = 'internal scratch']
  #allocation2 [shape = 'bf16[8,128]{1,0:T(8,128)(2,1)}', space=vmem, size = 0x800, scoped, tag = 'scratch operand']
  #allocation3 [shape = 'f32[8,128]{1,0:T(8,128)}', space=vmem, size = 0x1000, scoped, tag = 'scratch operand']
  %s0 = inlined_call_operand.hbm [shape: f32[1,8,512], index: 0, kind: input, shape index: {}]
  %s1 = inlined_call_operand.hbm [shape: f32[8,128], index: 1, kind: input, shape index: {}]
  %s2 = inlined_call_operand.hbm [shape: f32[8,128], index: 2, kind: input, shape index: {}]
  %s3 = inlined_call_operand.hbm [shape: bf16[128,512], index: 3, kind: input, shape index: {}]
  %s4 = inlined_call_operand.hbm [shape: f32[1,8,128], index: 4, kind: output, shape index: {0}]
  %s5 = inlined_call_operand.hbm [shape: f32[8,128], index: 5, kind: output, shape index: {1}]
  %6 = xla_tuple %s4, %s5
  %s7 = sld [smem:[#allocation0]]
  $region58: #{tpu_custom_call.1} parent=0
    _
  %s9 = ssub.s32 1, %s7
  %s10 = scalar_select 0, %s9, %s7
  $region1: #{tpu_custom_call.1} parent=0
    #allocation4 [shape = 'u8[16384]{0}', space=vmem, size = 0x4000, scoped, tag = 'input window, operand 0, single buffered']
    #allocation5 [shape = 's32[1]{0}', space=sflag, size = 0x4, scoped, tag = 'scoped memory for tpu_custom_call.1']
    #allocation6 [shape = 's32[1]{0}', space=sflag, size = 0x4, scoped, tag = 'scoped memory for tpu_custom_call.1']
    #allocation7 [shape = 'u8[4096]{0}', space=vmem, size = 0x1000, scoped, tag = 'input window, operand 1, single buffered']
    #allocation8 [shape = 's32[1]{0}', space=sflag, size = 0x4, scoped, tag = 'scoped memory for tpu_custom_call.1']
    #allocation9 [shape = 'u8[4096]{0}', space=vmem, size = 0x1000, scoped, tag = 'input window, operand 2, single buffered']
    #allocation10 [shape = 'u8[131072]{0}', space=vmem, size = 0x20000, scoped, tag = 'input window, operand 3, single buffered']
    #allocation11 [shape = 's32[1]{0}', space=sflag, size = 0x4, scoped, tag = 'scoped memory for tpu_custom_call.1']
    #allocation12 [shape = 'u8[4096]{0}', space=vmem, size = 0x1000, scoped, tag = 'output window, operand 0, single buffered']
    #allocation13 [shape = 'u8[4096]{0}', space=vmem, size = 0x1000, scoped, tag = 'output window, operand 1, single buffered']
    #allocation14 [shape = 's32[1]{0}', space=sflag, size = 0x4, scoped, tag = 'scoped memory for tpu_custom_call.1']
    %11 = vsyncpa [#allocation5], 0
    %12 = vsyncpa [#allocation8], 0
    %13 = vsyncpa [#allocation11], 0
    %14 = vsyncpa [#allocation6], 0
    %15 = vsyncpa [#allocation14], 0
    // Predicated region
    $region2: #{tpu_custom_call.1} parent=1 // pred_check
      _
    $region3: #{tpu_custom_call.1} parent=1 // pred_check_branch
      %17 = sbr.rel (0) target = $region5
    $region4: #{tpu_custom_call.1} parent=1 // pred_region
      %19 = vsyncadd [#allocation5], 0
      %s21 = sshll.u32 %s0, 4
      %s22 = int_to_ptr.hbm [resolvable:$true] %s21
      %s23 = sshll.u32 [#allocation4], 4
      %s24 = int_to_ptr.vmem [resolvable:$true] %s23
      %26 = dma.hbm_to_vmem [thread:$0]  %s22, 512, %s24, [#allocation5]
    $region5: #{tpu_custom_call.1} parent=1 // pred_fallthru
      _
    // Predicated region
    $region6: #{tpu_custom_call.1} parent=1 // pred_check
      _
    $region7: #{tpu_custom_call.1} parent=1 // pred_check_branch
      %28 = sbr.rel (0) target = $region9
    $region8: #{tpu_custom_call.1} parent=1 // pred_region
      %30 = vsyncadd [#allocation8], 0
      %s32 = sshll.u32 %s1, 4
      %s33 = int_to_ptr.hbm [resolvable:$true] %s32
      %s34 = sshll.u32 [#allocation7], 4
      %s35 = int_to_ptr.vmem [resolvable:$true] %s34
      %37 = dma.hbm_to_vmem [thread:$0]  %s33, 128, %s35, [#allocation8]
    $region9: #{tpu_custom_call.1} parent=1 // pred_fallthru
      _
    // Predicated region
    $region10: #{tpu_custom_call.1} parent=1 // pred_check
      _
    $region11: #{tpu_custom_call.1} parent=1 // pred_check_branch
      %39 = sbr.rel (0) target = $region13
    $region12: #{tpu_custom_call.1} parent=1 // pred_region
      %41 = vsyncadd [#allocation8], 0
      %s43 = sshll.u32 %s2, 4
      %s44 = int_to_ptr.hbm [resolvable:$true] %s43
      %s45 = sshll.u32 [#allocation9], 4
      %s46 = int_to_ptr.vmem [resolvable:$true] %s45
      %48 = dma.hbm_to_vmem [thread:$0]  %s44, 128, %s46, [#allocation8]
    $region13: #{tpu_custom_call.1} parent=1 // pred_fallthru
      _
    // Predicated region
    $region14: #{tpu_custom_call.1} parent=1 // pred_check
      _
    $region15: #{tpu_custom_call.1} parent=1 // pred_check_branch
      %50 = sbr.rel (0) target = $region17
    $region16: #{tpu_custom_call.1} parent=1 // pred_region
      %52 = vsyncadd [#allocation11], 0
      %s53 = sshll.u32 %s3, 4
      %s54 = int_to_ptr.hbm [resolvable:$true] %s53
      %s55 = sshll.u32 [#allocation10], 4
      %s56 = int_to_ptr.vmem [resolvable:$true] %s55
      %61 = dma.hbm_to_vmem [thread:$0]  %s54, 4096, %s56, [#allocation11], 256, 256, 16
    $region17: #{tpu_custom_call.1} parent=1 // pred_fallthru
      _
    // Predicated region
    $region18: #{tpu_custom_call.1} parent=1 // pred_check
      _
    $region19: #{tpu_custom_call.1} parent=1 // pred_check_branch
      %63 = sbr.rel (0) target = $region21
    $region20: #{tpu_custom_call.1} parent=1 // pred_region
      %65 = dma.done [#allocation5], 512
    $region21: #{tpu_custom_call.1} parent=1 // pred_fallthru
      _
    // Predicated region
    $region22: #{tpu_custom_call.1} parent=1 // pred_check
      _
    $region23: #{tpu_custom_call.1} parent=1 // pred_check_branch
      %67 = sbr.rel (0) target = $region25
    $region24: #{tpu_custom_call.1} parent=1 // pred_region
      %69 = dma.done [#allocation8], 128
    $region25: #{tpu_custom_call.1} parent=1 // pred_fallthru
      _
    // Predicated region
    $region26: #{tpu_custom_call.1} parent=1 // pred_check
      _
    $region27: #{tpu_custom_call.1} parent=1 // pred_check_branch
      %71 = sbr.rel (0) target = $region29
    $region28: #{tpu_custom_call.1} parent=1 // pred_region
      %73 = dma.done [#allocation8], 128
    $region29: #{tpu_custom_call.1} parent=1 // pred_fallthru
      _
    // Predicated region
    $region30: #{tpu_custom_call.1} parent=1 // pred_check
      _
    $region31: #{tpu_custom_call.1} parent=1 // pred_check_branch
      %75 = sbr.rel (0) target = $region33
    $region32: #{tpu_custom_call.1} parent=1 // pred_region
      %77 = dma.done [#allocation11], 4096
    $region33: #{tpu_custom_call.1} parent=1 // pred_fallthru
      _
    %p78 = scmp.eq.s32.totalorder 0, 0
    // Predicated region
    $region34: #{tpu_custom_call.1} parent=1 // pred_check
      %p79 = pneg %p78
    $region35: #{tpu_custom_call.1} parent=1 // pred_check_branch
      %81 = sbr.rel (%p79) target = $region37
    $region36: #{tpu_custom_call.1} parent=1 // pred_region
      %v82 = vld [vmem:[#allocation7] sm:$0xff]
      %v83 = vpack.c.bf16 %v82, %v82
      %84 = vst [vmem:[#allocation2] sm:$0xf] %v83
      %v85 = vld [vmem:[#allocation9] sm:$0xff]
      %86 = vst [vmem:[#allocation3] sm:$0xff] %v85
    $region37: #{tpu_custom_call.1} parent=1 // pred_fallthru
      _
    %v87 = vld [vmem:[#allocation10] sm:$0xff]
    %v88 = vld [vmem:[#allocation10 + $0x8] sm:$0xff]
    %v89 = vld [vmem:[#allocation10 + $0x10] sm:$0xff]
    %v90 = vld [vmem:[#allocation10 + $0x18] sm:$0xff]
    %v91 = vld [vmem:[#allocation10 + $0x20] sm:$0xff]
    %v92 = vld [vmem:[#allocation10 + $0x28] sm:$0xff]
    %v93 = vld [vmem:[#allocation10 + $0x30] sm:$0xff]
    %v94 = vld [vmem:[#allocation10 + $0x38] sm:$0xff]
    %v95 = vld [vmem:[#allocation10 + $0x40] sm:$0xff]
    %v96 = vld [vmem:[#allocation10 + $0x48] sm:$0xff]
    %v97 = vld [vmem:[#allocation10 + $0x50] sm:$0xff]
    %v98 = vld [vmem:[#allocation10 + $0x58] sm:$0xff]
    %v99 = vld [vmem:[#allocation10 + $0x60] sm:$0xff]
    %v100 = vld [vmem:[#allocation10 + $0x68] sm:$0xff]
    %v101 = vld [vmem:[#allocation10 + $0x70] sm:$0xff]
    %v102 = vld [vmem:[#allocation10 + $0x78] sm:$0xff]
    %v103 = vld [vmem:[#allocation10 + $0x80] sm:$0xff]
    %v104 = vld [vmem:[#allocation10 + $0x88] sm:$0xff]
    %v105 = vld [vmem:[#allocation10 + $0x90] sm:$0xff]
    %v106 = vld [vmem:[#allocation10 + $0x98] sm:$0xff]
    %v107 = vld [vmem:[#allocation10 + $0xa0] sm:$0xff]
    %v108 = vld [vmem:[#allocation10 + $0xa8] sm:$0xff]
    %v109 = vld [vmem:[#allocation10 + $0xb0] sm:$0xff]
    %v110 = vld [vmem:[#allocation10 + $0xb8] sm:$0xff]
    %v111 = vld [vmem:[#allocation10 + $0xc0] sm:$0xff]
    %v112 = vld [vmem:[#allocation10 + $0xc8] sm:$0xff]
    %v113 = vld [vmem:[#allocation10 + $0xd0] sm:$0xff]
    %v114 = vld [vmem:[#allocation10 + $0xd8] sm:$0xff]
    %v115 = vld [vmem:[#allocation10 + $0xe0] sm:$0xff]
    %v116 = vld [vmem:[#allocation10 + $0xe8] sm:$0xff]
    %v117 = vld [vmem:[#allocation10 + $0xf0] sm:$0xff]
    %v118 = vld [vmem:[#allocation10 + $0xf8] sm:$0xff]
    %v119 = vld [vmem:[#allocation2] sm:$0xf]
    %v120 = vld [vmem:[#allocation3] sm:$0xff]
    %v121 = vld [vmem:[#allocation4] sm:$0xff]
    %v122 = vld [vmem:[#allocation4 + $0x8] sm:$0xff]
    %v123 = vld [vmem:[#allocation4 + $0x10] sm:$0xff]
    %v124 = vld [vmem:[#allocation4 + $0x18] sm:$0xff]
    %v157 = vunpack.c.l.b16 %v87
    %v158 = vunpack.c.h.b16 %v87
    %v159 = vunpack.c.l.b16 %v88
    %v160 = vunpack.c.h.b16 %v88
    %v161 = vunpack.c.l.b16 %v89
    %v162 = vunpack.c.h.b16 %v89
    %v163 = vunpack.c.l.b16 %v90
    %v164 = vunpack.c.h.b16 %v90
    %v165 = vunpack.c.l.b16 %v91
    %v166 = vunpack.c.h.b16 %v91
    %v167 = vunpack.c.l.b16 %v92
    %v168 = vunpack.c.h.b16 %v92
    %v169 = vunpack.c.l.b16 %v93
    %v170 = vunpack.c.h.b16 %v93
    %v171 = vunpack.c.l.b16 %v94
    %v172 = vunpack.c.h.b16 %v94
    %v173 = vunpack.c.l.b16 %v95
    %v174 = vunpack.c.h.b16 %v95
    %v175 = vunpack.c.l.b16 %v96
    %v176 = vunpack.c.h.b16 %v96
    %v177 = vunpack.c.l.b16 %v97
    %v178 = vunpack.c.h.b16 %v97
    %v179 = vunpack.c.l.b16 %v98
    %v180 = vunpack.c.h.b16 %v98
    %v181 = vunpack.c.l.b16 %v99
    %v182 = vunpack.c.h.b16 %v99
    %v183 = vunpack.c.l.b16 %v100
    %v184 = vunpack.c.h.b16 %v100
    %v185 = vunpack.c.l.b16 %v101
    %v186 = vunpack.c.h.b16 %v101
    %v187 = vunpack.c.l.b16 %v102
    %v188 = vunpack.c.h.b16 %v102
    %v189 = vunpack.c.l.b16 %v103
    %v190 = vunpack.c.h.b16 %v103
    %v191 = vunpack.c.l.b16 %v104
    %v192 = vunpack.c.h.b16 %v104
    %v193 = vunpack.c.l.b16 %v105
    %v194 = vunpack.c.h.b16 %v105
    %v195 = vunpack.c.l.b16 %v106
    %v196 = vunpack.c.h.b16 %v106
    %v197 = vunpack.c.l.b16 %v107
    %v198 = vunpack.c.h.b16 %v107
    %v199 = vunpack.c.l.b16 %v108
    %v200 = vunpack.c.h.b16 %v108
    %v201 = vunpack.c.l.b16 %v109
    %v202 = vunpack.c.h.b16 %v109
    %v203 = vunpack.c.l.b16 %v110
    %v204 = vunpack.c.h.b16 %v110
    %v205 = vunpack.c.l.b16 %v111
    %v206 = vunpack.c.h.b16 %v111
    %v207 = vunpack.c.l.b16 %v112
    %v208 = vunpack.c.h.b16 %v112
    %v209 = vunpack.c.l.b16 %v113
    %v210 = vunpack.c.h.b16 %v113
    %v211 = vunpack.c.l.b16 %v114
    %v212 = vunpack.c.h.b16 %v114
    %v213 = vunpack.c.l.b16 %v115
    %v214 = vunpack.c.h.b16 %v115
    %v215 = vunpack.c.l.b16 %v116
    %v216 = vunpack.c.h.b16 %v116
    %v217 = vunpack.c.l.b16 %v117
    %v218 = vunpack.c.h.b16 %v117
    %v219 = vunpack.c.l.b16 %v118
    %v220 = vunpack.c.h.b16 %v118
    %v221 = vpack.c.b16 %v161, %v157
    %v222 = vpack.c.b16 %v162, %v158
    %v223 = vpack.c.b16 %v163, %v159
    %v224 = vpack.c.b16 %v164, %v160
    %v225 = vpack.c.b16 %v169, %v165
    %v226 = vpack.c.b16 %v170, %v166
    %v227 = vpack.c.b16 %v171, %v167
    %v228 = vpack.c.b16 %v172, %v168
    %v229 = vpack.c.b16 %v177, %v173
    %v230 = vpack.c.b16 %v178, %v174
    %v231 = vpack.c.b16 %v179, %v175
    %v232 = vpack.c.b16 %v180, %v176
    %v233 = vpack.c.b16 %v185, %v181
    %v234 = vpack.c.b16 %v186, %v182
    %v235 = vpack.c.b16 %v187, %v183
    %v236 = vpack.c.b16 %v188, %v184
    %v237 = vpack.c.b16 %v193, %v189
    %v238 = vpack.c.b16 %v194, %v190
    %v239 = vpack.c.b16 %v195, %v191
    %v240 = vpack.c.b16 %v196, %v192
    %v241 = vpack.c.b16 %v201, %v197
    %v242 = vpack.c.b16 %v202, %v198
    %v243 = vpack.c.b16 %v203, %v199
    %v244 = vpack.c.b16 %v204, %v200
    %v245 = vpack.c.b16 %v209, %v205
    %v246 = vpack.c.b16 %v210, %v206
    %v247 = vpack.c.b16 %v211, %v207
    %v248 = vpack.c.b16 %v212, %v208
    %v249 = vpack.c.b16 %v217, %v213
    %v250 = vpack.c.b16 %v218, %v214
    %v251 = vpack.c.b16 %v219, %v215
    %v252 = vpack.c.b16 %v220, %v216
    %285 = vmatpush.bf16.msra.mxu0 %v249
    %286 = vmatpush.bf16.msra.mxu0 %v245
    %287 = vmatpush.bf16.msra.mxu0 %v241
    %288 = vmatpush.bf16.msra.mxu0 %v237
    %289 = vmatpush.bf16.msra.mxu0 %v233
    %290 = vmatpush.bf16.msra.mxu0 %v229
    %291 = vmatpush.bf16.msra.mxu0 %v225
    %292 = vmatpush.bf16.msra.mxu0 %v221
    %293 = vmatmul.bf16.gmra.mxu0 %v119
    %v294 = vpop.f32.mrf.mxu0
    %v295 = vadd.f32 0.0, %v294
    %v296 = vpop.f32.mrf.mxu0
    %297 = vdwg.mxu0
    %298 = vmatpush.bf16.msra.mxu0 %v250
    %299 = vmatpush.bf16.msra.mxu0 %v246
    %300 = vmatpush.bf16.msra.mxu0 %v242
    %301 = vmatpush.bf16.msra.mxu0 %v238
    %302 = vmatpush.bf16.msra.mxu0 %v234
    %303 = vmatpush.bf16.msra.mxu0 %v230
    %304 = vmatpush.bf16.msra.mxu0 %v226
    %305 = vmatpush.bf16.msra.mxu0 %v222
    %306 = vmatmul.bf16.gmra.mxu0 %v119
    %v307 = vpop.f32.mrf.mxu0
    %v308 = vadd.f32 0.0, %v307
    %v309 = vpop.f32.mrf.mxu0
    %310 = vdwg.mxu0
    %311 = vmatpush.bf16.msra.mxu0 %v251
    %312 = vmatpush.bf16.msra.mxu0 %v247
    %313 = vmatpush.bf16.msra.mxu0 %v243
    %314 = vmatpush.bf16.msra.mxu0 %v239
    %315 = vmatpush.bf16.msra.mxu0 %v235
    %316 = vmatpush.bf16.msra.mxu0 %v231
    %317 = vmatpush.bf16.msra.mxu0 %v227
    %318 = vmatpush.bf16.msra.mxu0 %v223
    %319 = vmatmul.bf16.gmra.mxu0 %v119
    %v320 = vpop.f32.mrf.mxu0
    %v321 = vadd.f32 0.0, %v320
    %v322 = vpop.f32.mrf.mxu0
    %323 = vdwg.mxu0
    %324 = vmatpush.bf16.msra.mxu0 %v252
    %325 = vmatpush.bf16.msra.mxu0 %v248
    %326 = vmatpush.bf16.msra.mxu0 %v244
    %327 = vmatpush.bf16.msra.mxu0 %v240
    %328 = vmatpush.bf16.msra.mxu0 %v236
    %329 = vmatpush.bf16.msra.mxu0 %v232
    %330 = vmatpush.bf16.msra.mxu0 %v228
    %331 = vmatpush.bf16.msra.mxu0 %v224
    %332 = vmatmul.bf16.gmra.mxu0 %v119
    %v333 = vpop.f32.mrf.mxu0
    %v334 = vadd.f32 0.0, %v333
    %v335 = vpop.f32.mrf.mxu0
    %336 = vdwg.mxu0
    %v337 = vadd.f32 %v121, %v295
    %v338 = vadd.f32 %v122, %v308
    %v339 = vadd.f32 %v123, %v321
    %v340 = vadd.f32 %v124, %v334
    %v341 = vxor.u32 %v337, 2147483648
    %v342 = vmul.f32 %v341, 1.442695
    %v343 = vpow.pop %v342
    %v344 = vadd.f32 %v343, 1.0
    %v345 = vrcp.pop %v344
    %v346 = vmul.f32 %v344, %v345
    %v347 = vsub.f32 1.0, %v346
    %v348 = vmul.f32 %v345, %v347
    %v349 = vadd.f32 %v345, %v348
    %vm350 = vweird.f32 %v344
    %vm351 = vweird.f32 %v345
    %vm352 = vmor %vm350, %vm351
    %v353 = vsel %vm352, %v345, %v349
    %v354 = vand.u32 2147483647, %v344
    %vm355 = vcmp.eq.f32.partialorder %v354, 8.507059e+37
    %v356 = vand.u32 %v344, 2147483648
    %v357 = vor.u32 1.1754944e-38, %v356
    %v358 = vsel %vm355, %v357, %v353
    %v359 = vmul.f32 1.0, %v358
    %v360 = vxor.u32 %v338, 2147483648
    %v361 = vmul.f32 %v360, 1.442695
    %v362 = vpow.pop %v361
    %v363 = vadd.f32 %v362, 1.0
    %v364 = vrcp.pop %v363
    %v365 = vmul.f32 %v363, %v364
    %v366 = vsub.f32 1.0, %v365
    %v367 = vmul.f32 %v364, %v366
    %v368 = vadd.f32 %v364, %v367
    %vm369 = vweird.f32 %v363
    %vm370 = vweird.f32 %v364
    %vm371 = vmor %vm369, %vm370
    %v372 = vsel %vm371, %v364, %v368
    %v373 = vand.u32 2147483647, %v363
    %vm374 = vcmp.eq.f32.partialorder %v373, 8.507059e+37
    %v375 = vand.u32 %v363, 2147483648
    %v376 = vor.u32 1.1754944e-38, %v375
    %v377 = vsel %vm374, %v376, %v372
    %v378 = vmul.f32 1.0, %v377
    %v379 = vtanh.pop %v339
    %v380 = vxor.u32 %v340, 2147483648
    %v381 = vmul.f32 %v380, 1.442695
    %v382 = vpow.pop %v381
    %v383 = vadd.f32 %v382, 1.0
    %v384 = vrcp.pop %v383
    %v385 = vmul.f32 %v383, %v384
    %v386 = vsub.f32 1.0, %v385
    %v387 = vmul.f32 %v384, %v386
    %v388 = vadd.f32 %v384, %v387
    %vm389 = vweird.f32 %v383
    %vm390 = vweird.f32 %v384
    %vm391 = vmor %vm389, %vm390
    %v392 = vsel %vm391, %v384, %v388
    %v393 = vand.u32 2147483647, %v383
    %vm394 = vcmp.eq.f32.partialorder %v393, 8.507059e+37
    %v395 = vand.u32 %v383, 2147483648
    %v396 = vor.u32 1.1754944e-38, %v395
    %v397 = vsel %vm394, %v396, %v392
    %v398 = vmul.f32 1.0, %v397
    %v399 = vmul.f32 %v378, %v120
    %v400 = vmul.f32 %v359, %v379
    %v401 = vadd.f32 %v399, %v400
    %v402 = vtanh.pop %v401
    %v403 = vmul.f32 %v398, %v402
    %404 = vst [vmem:[#allocation12] sm:$0xff] %v403
    %v405 = vpack.c.bf16 %v403, %v403
    %406 = vst [vmem:[#allocation2] sm:$0xf] %v405
    %407 = vst [vmem:[#allocation3] sm:$0xff] %v401
    // Predicated region
    $region38: #{tpu_custom_call.1} parent=1 // pred_check
      %p408 = pneg %p78
    $region39: #{tpu_custom_call.1} parent=1 // pred_check_branch
      %410 = sbr.rel (%p408) target = $region41
    $region40: #{tpu_custom_call.1} parent=1 // pred_region
      %411 = vst [vmem:[#allocation13] sm:$0xff] %v401
    $region41: #{tpu_custom_call.1} parent=1 // pred_fallthru
      _
    // Predicated region
    $region42: #{tpu_custom_call.1} parent=1 // pred_check
      _
    $region43: #{tpu_custom_call.1} parent=1 // pred_check_branch
      %413 = sbr.rel (0) target = $region45
    $region44: #{tpu_custom_call.1} parent=1 // pred_region
      %415 = vsyncadd [#allocation6], 0
      %s417 = sshll.u32 [#allocation12], 4
      %s418 = int_to_ptr.vmem [resolvable:$true] %s417
      %s419 = sshll.u32 %s4, 4
      %s420 = int_to_ptr.hbm [resolvable:$true] %s419
      %422 = dma.vmem_to_hbm [thread:$0]  %s418, 128, %s420, [#allocation6]
    $region45: #{tpu_custom_call.1} parent=1 // pred_fallthru
      _
    // Predicated region
    $region46: #{tpu_custom_call.1} parent=1 // pred_check
      _
    $region47: #{tpu_custom_call.1} parent=1 // pred_check_branch
      %424 = sbr.rel (0) target = $region49
    $region48: #{tpu_custom_call.1} parent=1 // pred_region
      %426 = vsyncadd [#allocation14], 0
      %s428 = sshll.u32 [#allocation13], 4
      %s429 = int_to_ptr.vmem [resolvable:$true] %s428
      %s430 = sshll.u32 %s5, 4
      %s431 = int_to_ptr.hbm [resolvable:$true] %s430
      %433 = dma.vmem_to_hbm [thread:$0]  %s429, 128, %s431, [#allocation14]
    $region49: #{tpu_custom_call.1} parent=1 // pred_fallthru
      _
    // Predicated region
    $region50: #{tpu_custom_call.1} parent=1 // pred_check
      _
    $region51: #{tpu_custom_call.1} parent=1 // pred_check_branch
      %435 = sbr.rel (0) target = $region53
    $region52: #{tpu_custom_call.1} parent=1 // pred_region
      %437 = dma.done [#allocation6], 128
    $region53: #{tpu_custom_call.1} parent=1 // pred_fallthru
      _
    // Predicated region
    $region54: #{tpu_custom_call.1} parent=1 // pred_check
      _
    $region55: #{tpu_custom_call.1} parent=1 // pred_check_branch
      %439 = sbr.rel (0) target = $region57
    $region56: #{tpu_custom_call.1} parent=1 // pred_region
      %441 = dma.done [#allocation14], 128
    $region57: #{tpu_custom_call.1} parent=1 // pred_fallthru
      _
    %442 = vsyncpa [#allocation5], 1
    %443 = vsyncpa [#allocation8], 1
    %444 = vsyncpa [#allocation11], 1
    %445 = vsyncpa [#allocation6], 1
    %446 = vsyncpa [#allocation14], 1

// kernel: tpu_custom_call.1
$region0: #{tpu_custom_call.1}
  #allocation0 [shape = 'u32[]', space=smem, size = 0x4, offset = 0x4, fixed_abs, tag = 'smem constant byte address 0x4 - core index']
  #allocation1 [shape = 'u32[72,128]{1,0:T(1,128)}', space=vmem, size = 0x9000, scoped, tag = 'internal scratch']
  #allocation2 [shape = 'bf16[8,128]{1,0:T(8,128)(2,1)}', space=vmem, size = 0x800, scoped, tag = 'scratch operand']
  #allocation3 [shape = 'f32[8,128]{1,0:T(8,128)}', space=vmem, size = 0x1000, scoped, tag = 'scratch operand']
  %s0 = inlined_call_operand.hbm [shape: f32[1,8,512], index: 0, kind: input, shape index: {}]
  %s1 = inlined_call_operand.hbm [shape: f32[8,128], index: 1, kind: input, shape index: {}]
  %s2 = inlined_call_operand.hbm [shape: f32[8,128], index: 2, kind: input, shape index: {}]
  %s3 = inlined_call_operand.hbm [shape: bf16[128,512], index: 3, kind: input, shape index: {}]
  %s4 = inlined_call_operand.hbm [shape: f32[1,8,128], index: 4, kind: output, shape index: {0}]
  %s5 = inlined_call_operand.hbm [shape: f32[8,128], index: 5, kind: output, shape index: {1}]
  %6 = xla_tuple %s4, %s5
  %s7 = sld [smem:[#allocation0]]
  $region58: #{tpu_custom_call.1} parent=0
    _
  %s9 = ssub.s32 1, %s7
  %s10 = scalar_select 0, %s9, %s7
  $region1: #{tpu_custom_call.1} parent=0
    #allocation4 [shape = 'u8[16384]{0}', space=vmem, size = 0x4000, scoped, tag = 'input window, operand 0, single buffered']
    #allocation5 [shape = 's32[1]{0}', space=sflag, size = 0x4, scoped, tag = 'scoped memory for tpu_custom_call.1']
    #allocation6 [shape = 's32[1]{0}', space=sflag, size = 0x4, scoped, tag = 'scoped memory for tpu_custom_call.1']
    #allocation7 [shape = 'u8[4096]{0}', space=vmem, size = 0x1000, scoped, tag = 'input window, operand 1, single buffered']
    #allocation8 [shape = 's32[1]{0}', space=sflag, size = 0x4, scoped, tag = 'scoped memory for tpu_custom_call.1']
    #allocation9 [shape = 'u8[4096]{0}', space=vmem, size = 0x1000, scoped, tag = 'input window, operand 2, single buffered']
    #allocation10 [shape = 'u8[131072]{0}', space=vmem, size = 0x20000, scoped, tag = 'input window, operand 3, single buffered']
    #allocation11 [shape = 's32[1]{0}', space=sflag, size = 0x4, scoped, tag = 'scoped memory for tpu_custom_call.1']
    #allocation12 [shape = 'u8[4096]{0}', space=vmem, size = 0x1000, scoped, tag = 'output window, operand 0, single buffered']
    #allocation13 [shape = 'u8[4096]{0}', space=vmem, size = 0x1000, scoped, tag = 'output window, operand 1, single buffered']
    #allocation14 [shape = 's32[1]{0}', space=sflag, size = 0x4, scoped, tag = 'scoped memory for tpu_custom_call.1']
    %11 = vsyncpa [#allocation5], 0
    %12 = vsyncpa [#allocation8], 0
    %13 = vsyncpa [#allocation11], 0
    %14 = vsyncpa [#allocation6], 0
    %15 = vsyncpa [#allocation14], 0
    // Predicated region
    $region2: #{tpu_custom_call.1} parent=1 // pred_check
      _
    $region3: #{tpu_custom_call.1} parent=1 // pred_check_branch
      %17 = sbr.rel (0) target = $region5
    $region4: #{tpu_custom_call.1} parent=1 // pred_region
      %19 = vsyncadd [#allocation5], 0
      %s21 = sshll.u32 %s0, 4
      %s22 = int_to_ptr.hbm [resolvable:$true] %s21
      %s23 = sshll.u32 [#allocation4], 4
      %s24 = int_to_ptr.vmem [resolvable:$true] %s23
      %26 = dma.hbm_to_vmem [thread:$0]  %s22, 512, %s24, [#allocation5]
    $region5: #{tpu_custom_call.1} parent=1 // pred_fallthru
      _
    // Predicated region
    $region6: #{tpu_custom_call.1} parent=1 // pred_check
      _
    $region7: #{tpu_custom_call.1} parent=1 // pred_check_branch
      %28 = sbr.rel (0) target = $region9
    $region8: #{tpu_custom_call.1} parent=1 // pred_region
      %30 = vsyncadd [#allocation8], 0
      %s32 = sshll.u32 %s1, 4
      %s33 = int_to_ptr.hbm [resolvable:$true] %s32
      %s34 = sshll.u32 [#allocation7], 4
      %s35 = int_to_ptr.vmem [resolvable:$true] %s34
      %37 = dma.hbm_to_vmem [thread:$0]  %s33, 128, %s35, [#allocation8]
    $region9: #{tpu_custom_call.1} parent=1 // pred_fallthru
      _
    // Predicated region
    $region10: #{tpu_custom_call.1} parent=1 // pred_check
      _
    $region11: #{tpu_custom_call.1} parent=1 // pred_check_branch
      %39 = sbr.rel (0) target = $region13
    $region12: #{tpu_custom_call.1} parent=1 // pred_region
      %41 = vsyncadd [#allocation8], 0
      %s43 = sshll.u32 %s2, 4
      %s44 = int_to_ptr.hbm [resolvable:$true] %s43
      %s45 = sshll.u32 [#allocation9], 4
      %s46 = int_to_ptr.vmem [resolvable:$true] %s45
      %48 = dma.hbm_to_vmem [thread:$0]  %s44, 128, %s46, [#allocation8]
    $region13: #{tpu_custom_call.1} parent=1 // pred_fallthru
      _
    // Predicated region
    $region14: #{tpu_custom_call.1} parent=1 // pred_check
      _
    $region15: #{tpu_custom_call.1} parent=1 // pred_check_branch
      %50 = sbr.rel (0) target = $region17
    $region16: #{tpu_custom_call.1} parent=1 // pred_region
      %52 = vsyncadd [#allocation11], 0
      %s53 = sshll.u32 %s3, 4
      %s54 = int_to_ptr.hbm [resolvable:$true] %s53
      %s55 = sshll.u32 [#allocation10], 4
      %s56 = int_to_ptr.vmem [resolvable:$true] %s55
      %61 = dma.hbm_to_vmem [thread:$0]  %s54, 4096, %s56, [#allocation11], 256, 256, 16
    $region17: #{tpu_custom_call.1} parent=1 // pred_fallthru
      _
    // Predicated region
    $region18: #{tpu_custom_call.1} parent=1 // pred_check
      _
    $region19: #{tpu_custom_call.1} parent=1 // pred_check_branch
      %63 = sbr.rel (0) target = $region21
    $region20: #{tpu_custom_call.1} parent=1 // pred_region
      %65 = dma.done [#allocation5], 512
    $region21: #{tpu_custom_call.1} parent=1 // pred_fallthru
      _
    // Predicated region
    $region22: #{tpu_custom_call.1} parent=1 // pred_check
      _
    $region23: #{tpu_custom_call.1} parent=1 // pred_check_branch
      %67 = sbr.rel (0) target = $region25
    $region24: #{tpu_custom_call.1} parent=1 // pred_region
      %69 = dma.done [#allocation8], 128
    $region25: #{tpu_custom_call.1} parent=1 // pred_fallthru
      _
    // Predicated region
    $region26: #{tpu_custom_call.1} parent=1 // pred_check
      _
    $region27: #{tpu_custom_call.1} parent=1 // pred_check_branch
      %71 = sbr.rel (0) target = $region29
    $region28: #{tpu_custom_call.1} parent=1 // pred_region
      %73 = dma.done [#allocation8], 128
    $region29: #{tpu_custom_call.1} parent=1 // pred_fallthru
      _
    // Predicated region
    $region30: #{tpu_custom_call.1} parent=1 // pred_check
      _
    $region31: #{tpu_custom_call.1} parent=1 // pred_check_branch
      %75 = sbr.rel (0) target = $region33
    $region32: #{tpu_custom_call.1} parent=1 // pred_region
      %77 = dma.done [#allocation11], 4096
    $region33: #{tpu_custom_call.1} parent=1 // pred_fallthru
      _
    %p78 = scmp.eq.s32.totalorder 0, 0
    // Predicated region
    $region34: #{tpu_custom_call.1} parent=1 // pred_check
      %p79 = pneg %p78
    $region35: #{tpu_custom_call.1} parent=1 // pred_check_branch
      %81 = sbr.rel (%p79) target = $region37
    $region36: #{tpu_custom_call.1} parent=1 // pred_region
      %v82 = vld [vmem:[#allocation7] sm:$0xff]
      %v83 = vpack.c.bf16 %v82, %v82
      %84 = vst [vmem:[#allocation2] sm:$0xf] %v83
      %v85 = vld [vmem:[#allocation9] sm:$0xff]
      %86 = vst [vmem:[#allocation3] sm:$0xff] %v85
    $region37: #{tpu_custom_call.1} parent=1 // pred_fallthru
      _
    %v87 = vld [vmem:[#allocation10] sm:$0xff]
    %v88 = vld [vmem:[#allocation10 + $0x8] sm:$0xff]
    %v89 = vld [vmem:[#allocation10 + $0x10] sm:$0xff]
    %v90 = vld [vmem:[#allocation10 + $0x18] sm:$0xff]
    %v91 = vld [vmem:[#allocation10 + $0x20] sm:$0xff]
    %v92 = vld [vmem:[#allocation10 + $0x28] sm:$0xff]
    %v93 = vld [vmem:[#allocation10 + $0x30] sm:$0xff]
    %v94 = vld [vmem:[#allocation10 + $0x38] sm:$0xff]
    %v95 = vld [vmem:[#allocation10 + $0x40] sm:$0xff]
    %v96 = vld [vmem:[#allocation10 + $0x48] sm:$0xff]
    %v97 = vld [vmem:[#allocation10 + $0x50] sm:$0xff]
    %v98 = vld [vmem:[#allocation10 + $0x58] sm:$0xff]
    %v99 = vld [vmem:[#allocation10 + $0x60] sm:$0xff]
    %v100 = vld [vmem:[#allocation10 + $0x68] sm:$0xff]
    %v101 = vld [vmem:[#allocation10 + $0x70] sm:$0xff]
    %v102 = vld [vmem:[#allocation10 + $0x78] sm:$0xff]
    %v103 = vld [vmem:[#allocation10 + $0x80] sm:$0xff]
    %v104 = vld [vmem:[#allocation10 + $0x88] sm:$0xff]
    %v105 = vld [vmem:[#allocation10 + $0x90] sm:$0xff]
    %v106 = vld [vmem:[#allocation10 + $0x98] sm:$0xff]
    %v107 = vld [vmem:[#allocation10 + $0xa0] sm:$0xff]
    %v108 = vld [vmem:[#allocation10 + $0xa8] sm:$0xff]
    %v109 = vld [vmem:[#allocation10 + $0xb0] sm:$0xff]
    %v110 = vld [vmem:[#allocation10 + $0xb8] sm:$0xff]
    %v111 = vld [vmem:[#allocation10 + $0xc0] sm:$0xff]
    %v112 = vld [vmem:[#allocation10 + $0xc8] sm:$0xff]
    %v113 = vld [vmem:[#allocation10 + $0xd0] sm:$0xff]
    %v114 = vld [vmem:[#allocation10 + $0xd8] sm:$0xff]
    %v115 = vld [vmem:[#allocation10 + $0xe0] sm:$0xff]
    %v116 = vld [vmem:[#allocation10 + $0xe8] sm:$0xff]
    %v117 = vld [vmem:[#allocation10 + $0xf0] sm:$0xff]
    %v118 = vld [vmem:[#allocation10 + $0xf8] sm:$0xff]
    %v119 = vld [vmem:[#allocation2] sm:$0xf]
    %v120 = vld [vmem:[#allocation3] sm:$0xff]
    %v121 = vld [vmem:[#allocation4] sm:$0xff]
    %v122 = vld [vmem:[#allocation4 + $0x8] sm:$0xff]
    %v123 = vld [vmem:[#allocation4 + $0x10] sm:$0xff]
    %v124 = vld [vmem:[#allocation4 + $0x18] sm:$0xff]
    %v157 = vunpack.c.l.b16 %v87
    %v158 = vunpack.c.h.b16 %v87
    %v159 = vunpack.c.l.b16 %v88
    %v160 = vunpack.c.h.b16 %v88
    %v161 = vunpack.c.l.b16 %v89
    %v162 = vunpack.c.h.b16 %v89
    %v163 = vunpack.c.l.b16 %v90
    %v164 = vunpack.c.h.b16 %v90
    %v165 = vunpack.c.l.b16 %v91
    %v166 = vunpack.c.h.b16 %v91
    %v167 = vunpack.c.l.b16 %v92
    %v168 = vunpack.c.h.b16 %v92
    %v169 = vunpack.c.l.b16 %v93
    %v170 = vunpack.c.h.b16 %v93
    %v171 = vunpack.c.l.b16 %v94
    %v172 = vunpack.c.h.b16 %v94
    %v173 = vunpack.c.l.b16 %v95
    %v174 = vunpack.c.h.b16 %v95
    %v175 = vunpack.c.l.b16 %v96
    %v176 = vunpack.c.h.b16 %v96
    %v177 = vunpack.c.l.b16 %v97
    %v178 = vunpack.c.h.b16 %v97
    %v179 = vunpack.c.l.b16 %v98
    %v180 = vunpack.c.h.b16 %v98
    %v181 = vunpack.c.l.b16 %v99
    %v182 = vunpack.c.h.b16 %v99
    %v183 = vunpack.c.l.b16 %v100
    %v184 = vunpack.c.h.b16 %v100
    %v185 = vunpack.c.l.b16 %v101
    %v186 = vunpack.c.h.b16 %v101
    %v187 = vunpack.c.l.b16 %v102
    %v188 = vunpack.c.h.b16 %v102
    %v189 = vunpack.c.l.b16 %v103
    %v190 = vunpack.c.h.b16 %v103
    %v191 = vunpack.c.l.b16 %v104
    %v192 = vunpack.c.h.b16 %v104
    %v193 = vunpack.c.l.b16 %v105
    %v194 = vunpack.c.h.b16 %v105
    %v195 = vunpack.c.l.b16 %v106
    %v196 = vunpack.c.h.b16 %v106
    %v197 = vunpack.c.l.b16 %v107
    %v198 = vunpack.c.h.b16 %v107
    %v199 = vunpack.c.l.b16 %v108
    %v200 = vunpack.c.h.b16 %v108
    %v201 = vunpack.c.l.b16 %v109
    %v202 = vunpack.c.h.b16 %v109
    %v203 = vunpack.c.l.b16 %v110
    %v204 = vunpack.c.h.b16 %v110
    %v205 = vunpack.c.l.b16 %v111
    %v206 = vunpack.c.h.b16 %v111
    %v207 = vunpack.c.l.b16 %v112
    %v208 = vunpack.c.h.b16 %v112
    %v209 = vunpack.c.l.b16 %v113
    %v210 = vunpack.c.h.b16 %v113
    %v211 = vunpack.c.l.b16 %v114
    %v212 = vunpack.c.h.b16 %v114
    %v213 = vunpack.c.l.b16 %v115
    %v214 = vunpack.c.h.b16 %v115
    %v215 = vunpack.c.l.b16 %v116
    %v216 = vunpack.c.h.b16 %v116
    %v217 = vunpack.c.l.b16 %v117
    %v218 = vunpack.c.h.b16 %v117
    %v219 = vunpack.c.l.b16 %v118
    %v220 = vunpack.c.h.b16 %v118
    %v221 = vpack.c.b16 %v161, %v157
    %v222 = vpack.c.b16 %v162, %v158
    %v223 = vpack.c.b16 %v163, %v159
    %v224 = vpack.c.b16 %v164, %v160
    %v225 = vpack.c.b16 %v169, %v165
    %v226 = vpack.c.b16 %v170, %v166
    %v227 = vpack.c.b16 %v171, %v167
    %v228 = vpack.c.b16 %v172, %v168
    %v229 = vpack.c.b16 %v177, %v173
    %v230 = vpack.c.b16 %v178, %v174
    %v231 = vpack.c.b16 %v179, %v175
    %v232 = vpack.c.b16 %v180, %v176
    %v233 = vpack.c.b16 %v185, %v181
    %v234 = vpack.c.b16 %v186, %v182
    %v235 = vpack.c.b16 %v187, %v183
    %v236 = vpack.c.b16 %v188, %v184
    %v237 = vpack.c.b16 %v193, %v189
    %v238 = vpack.c.b16 %v194, %v190
    %v239 = vpack.c.b16 %v195, %v191
    %v240 = vpack.c.b16 %v196, %v192
    %v241 = vpack.c.b16 %v201, %v197
    %v242 = vpack.c.b16 %v202, %v198
    %v243 = vpack.c.b16 %v203, %v199
    %v244 = vpack.c.b16 %v204, %v200
    %v245 = vpack.c.b16 %v209, %v205
    %v246 = vpack.c.b16 %v210, %v206
    %v247 = vpack.c.b16 %v211, %v207
    %v248 = vpack.c.b16 %v212, %v208
    %v249 = vpack.c.b16 %v217, %v213
    %v250 = vpack.c.b16 %v218, %v214
    %v251 = vpack.c.b16 %v219, %v215
    %v252 = vpack.c.b16 %v220, %v216
    %285 = vmatpush.bf16.msra.mxu0 %v249
    %286 = vmatpush.bf16.msra.mxu0 %v245
    %287 = vmatpush.bf16.msra.mxu0 %v241
    %288 = vmatpush.bf16.msra.mxu0 %v237
    %289 = vmatpush.bf16.msra.mxu0 %v233
    %290 = vmatpush.bf16.msra.mxu0 %v229
    %291 = vmatpush.bf16.msra.mxu0 %v225
    %292 = vmatpush.bf16.msra.mxu0 %v221
    %293 = vmatmul.bf16.gmra.mxu0 %v119
    %v294 = vpop.f32.mrf.mxu0
    %v295 = vadd.f32 0.0, %v294
    %v296 = vpop.f32.mrf.mxu0
    %297 = vdwg.mxu0
    %298 = vmatpush.bf16.msra.mxu0 %v250
    %299 = vmatpush.bf16.msra.mxu0 %v246
    %300 = vmatpush.bf16.msra.mxu0 %v242
    %301 = vmatpush.bf16.msra.mxu0 %v238
    %302 = vmatpush.bf16.msra.mxu0 %v234
    %303 = vmatpush.bf16.msra.mxu0 %v230
    %304 = vmatpush.bf16.msra.mxu0 %v226
    %305 = vmatpush.bf16.msra.mxu0 %v222
    %306 = vmatmul.bf16.gmra.mxu0 %v119
    %v307 = vpop.f32.mrf.mxu0
    %v308 = vadd.f32 0.0, %v307
    %v309 = vpop.f32.mrf.mxu0
    %310 = vdwg.mxu0
    %311 = vmatpush.bf16.msra.mxu0 %v251
    %312 = vmatpush.bf16.msra.mxu0 %v247
    %313 = vmatpush.bf16.msra.mxu0 %v243
    %314 = vmatpush.bf16.msra.mxu0 %v239
    %315 = vmatpush.bf16.msra.mxu0 %v235
    %316 = vmatpush.bf16.msra.mxu0 %v231
    %317 = vmatpush.bf16.msra.mxu0 %v227
    %318 = vmatpush.bf16.msra.mxu0 %v223
    %319 = vmatmul.bf16.gmra.mxu0 %v119
    %v320 = vpop.f32.mrf.mxu0
    %v321 = vadd.f32 0.0, %v320
    %v322 = vpop.f32.mrf.mxu0
    %323 = vdwg.mxu0
    %324 = vmatpush.bf16.msra.mxu0 %v252
    %325 = vmatpush.bf16.msra.mxu0 %v248
    %326 = vmatpush.bf16.msra.mxu0 %v244
    %327 = vmatpush.bf16.msra.mxu0 %v240
    %328 = vmatpush.bf16.msra.mxu0 %v236
    %329 = vmatpush.bf16.msra.mxu0 %v232
    %330 = vmatpush.bf16.msra.mxu0 %v228
    %331 = vmatpush.bf16.msra.mxu0 %v224
    %332 = vmatmul.bf16.gmra.mxu0 %v119
    %v333 = vpop.f32.mrf.mxu0
    %v334 = vadd.f32 0.0, %v333
    %v335 = vpop.f32.mrf.mxu0
    %336 = vdwg.mxu0
    %v337 = vadd.f32 %v121, %v295
    %v338 = vadd.f32 %v122, %v308
    %v339 = vadd.f32 %v123, %v321
    %v340 = vadd.f32 %v124, %v334
    %v341 = vxor.u32 %v337, 2147483648
    %v342 = vmul.f32 %v341, 1.442695
    %v343 = vpow.pop %v342
    %v344 = vadd.f32 %v343, 1.0
    %v345 = vrcp.pop %v344
    %v346 = vmul.f32 %v344, %v345
    %v347 = vsub.f32 1.0, %v346
    %v348 = vmul.f32 %v345, %v347
    %v349 = vadd.f32 %v345, %v348
    %vm350 = vweird.f32 %v344
    %vm351 = vweird.f32 %v345
    %vm352 = vmor %vm350, %vm351
    %v353 = vsel %vm352, %v345, %v349
    %v354 = vand.u32 2147483647, %v344
    %vm355 = vcmp.eq.f32.partialorder %v354, 8.507059e+37
    %v356 = vand.u32 %v344, 2147483648
    %v357 = vor.u32 1.1754944e-38, %v356
    %v358 = vsel %vm355, %v357, %v353
    %v359 = vmul.f32 1.0, %v358
    %v360 = vxor.u32 %v338, 2147483648
    %v361 = vmul.f32 %v360, 1.442695
    %v362 = vpow.pop %v361
    %v363 = vadd.f32 %v362, 1.0
    %v364 = vrcp.pop %v363
    %v365 = vmul.f32 %v363, %v364
    %v366 = vsub.f32 1.0, %v365
    %v367 = vmul.f32 %v364, %v366
    %v368 = vadd.f32 %v364, %v367
    %vm369 = vweird.f32 %v363
    %vm370 = vweird.f32 %v364
    %vm371 = vmor %vm369, %vm370
    %v372 = vsel %vm371, %v364, %v368
    %v373 = vand.u32 2147483647, %v363
    %vm374 = vcmp.eq.f32.partialorder %v373, 8.507059e+37
    %v375 = vand.u32 %v363, 2147483648
    %v376 = vor.u32 1.1754944e-38, %v375
    %v377 = vsel %vm374, %v376, %v372
    %v378 = vmul.f32 1.0, %v377
    %v379 = vtanh.pop %v339
    %v380 = vxor.u32 %v340, 2147483648
    %v381 = vmul.f32 %v380, 1.442695
    %v382 = vpow.pop %v381
    %v383 = vadd.f32 %v382, 1.0
    %v384 = vrcp.pop %v383
    %v385 = vmul.f32 %v383, %v384
    %v386 = vsub.f32 1.0, %v385
    %v387 = vmul.f32 %v384, %v386
    %v388 = vadd.f32 %v384, %v387
    %vm389 = vweird.f32 %v383
    %vm390 = vweird.f32 %v384
    %vm391 = vmor %vm389, %vm390
    %v392 = vsel %vm391, %v384, %v388
    %v393 = vand.u32 2147483647, %v383
    %vm394 = vcmp.eq.f32.partialorder %v393, 8.507059e+37
    %v395 = vand.u32 %v383, 2147483648
    %v396 = vor.u32 1.1754944e-38, %v395
    %v397 = vsel %vm394, %v396, %v392
    %v398 = vmul.f32 1.0, %v397
    %v399 = vmul.f32 %v378, %v120
    %v400 = vmul.f32 %v359, %v379
    %v401 = vadd.f32 %v399, %v400
    %v402 = vtanh.pop %v401
    %v403 = vmul.f32 %v398, %v402
    %404 = vst [vmem:[#allocation12] sm:$0xff] %v403
    %v405 = vpack.c.bf16 %v403, %v403
    %406 = vst [vmem:[#allocation2] sm:$0xf] %v405
    %407 = vst [vmem:[#allocation3] sm:$0xff] %v401
    // Predicated region
    $region38: #{tpu_custom_call.1} parent=1 // pred_check
      %p408 = pneg %p78
    $region39: #{tpu_custom_call.1} parent=1 // pred_check_branch
      %410 = sbr.rel (%p408) target = $region41
    $region40: #{tpu_custom_call.1} parent=1 // pred_region
      %411 = vst [vmem:[#allocation13] sm:$0xff] %v401
    $region41: #{tpu_custom_call.1} parent=1 // pred_fallthru
      _
    // Predicated region
    $region42: #{tpu_custom_call.1} parent=1 // pred_check
      _
    $region43: #{tpu_custom_call.1} parent=1 // pred_check_branch
      %413 = sbr.rel (0) target = $region45
    $region44: #{tpu_custom_call.1} parent=1 // pred_region
      %415 = vsyncadd [#allocation6], 0
      %s417 = sshll.u32 [#allocation12], 4
      %s418 = int_to_ptr.vmem [resolvable:$true] %s417
      %s419 = sshll.u32 %s4, 4
      %s420 = int_to_ptr.hbm [resolvable:$true] %s419
      %422 = dma.vmem_to_hbm [thread:$0]  %s418, 128, %s420, [#allocation6]
    $region45: #{tpu_custom_call.1} parent=1 // pred_fallthru
      _
    // Predicated region
    $region46: #{tpu_custom_call.1} parent=1 // pred_check
      _
    $region47: #{tpu_custom_call.1} parent=1 // pred_check_branch
      %424 = sbr.rel (0) target = $region49
    $region48: #{tpu_custom_call.1} parent=1 // pred_region
      %426 = vsyncadd [#allocation14], 0
      %s428 = sshll.u32 [#allocation13], 4
      %s429 = int_to_ptr.vmem [resolvable:$true] %s428
      %s430 = sshll.u32 %s5, 4
      %s431 = int_to_ptr.hbm [resolvable:$true] %s430
      %433 = dma.vmem_to_hbm [thread:$0]  %s429, 128, %s431, [#allocation14]
    $region49: #{tpu_custom_call.1} parent=1 // pred_fallthru
      _
    // Predicated region
    $region50: #{tpu_custom_call.1} parent=1 // pred_check
      _
    $region51: #{tpu_custom_call.1} parent=1 // pred_check_branch
      %435 = sbr.rel (0) target = $region53
    $region52: #{tpu_custom_call.1} parent=1 // pred_region
      %437 = dma.done [#allocation6], 128
    $region53: #{tpu_custom_call.1} parent=1 // pred_fallthru
      _
    // Predicated region
    $region54: #{tpu_custom_call.1} parent=1 // pred_check
      _
    $region55: #{tpu_custom_call.1} parent=1 // pred_check_branch
      %439 = sbr.rel (0) target = $region57
    $region56: #{tpu_custom_call.1} parent=1 // pred_region
      %441 = dma.done [#allocation14], 128
    $region57: #{tpu_custom_call.1} parent=1 // pred_fallthru
      _
    %442 = vsyncpa [#allocation5], 1
    %443 = vsyncpa [#allocation8], 1
    %444 = vsyncpa [#allocation11], 1
    %445 = vsyncpa [#allocation6], 1
    %446 = vsyncpa [#allocation14], 1

</llo_original>
